<compile_context>
chip_gen: v5e
topology: v5e:2x2
jax: 0.10.0
libtpu: 0.0.40
codegen_flags: <defaults>
</compile_context>

<pallas_src>
import functools

import jax
import jax.numpy as jnp
from jax.experimental import pallas as pl
from jax.experimental.pallas import tpu as pltpu

# ~4 MiB of data per operand per grid step: on the measured HBM-roofline
# plateau, while double/triple buffering still fits scoped VMEM everywhere.
BLOCK_BYTES = 4 * 1024 * 1024


def _cdiv(a, b):
    return -(-a // b)


def _round_up(a, b):
    return _cdiv(a, b) * b


def _sublane(dtype):
    # Native sublane tile height per element width.
    return {4: 8, 2: 16, 1: 32}.get(jnp.dtype(dtype).itemsize, 8)


def _tpu_kind():
    try:
        return jax.devices()[0].device_kind.lower()
    except Exception:
        return ""


def _is_v7x(kind):
    return "7" in kind


def _num_tensorcores(kind):
    # Explicit core split only pays off on 2-TensorCore-per-device chips
    # (v7x).  On v5e/v6e it is a serial loop plus a spare masked block.
    return 2 if _is_v7x(kind) else 1


def _in_spec(block_shape, index_map, deep):
    # 3-deep input pipelining on v7x only; degrade gracefully if the
    # installed Pallas version does not accept pipeline_mode.
    if deep:
        try:
            return pl.BlockSpec(block_shape, index_map,
                                pipeline_mode=pl.Buffered(3))
        except (TypeError, AttributeError):
            pass
    return pl.BlockSpec(block_shape, index_map)


def _pick_lanes(n):
    for lanes in (512, 256, 128):
        if n % lanes == 0:
            return lanes
    return None


def _sq_diff_kernel(a_ref, b_ref, o_ref):
    d = a_ref[...] - b_ref[...]
    o_ref[...] = d * d


def _mse_partial_kernel(a_ref, b_ref, o_ref, *, rows_valid, block_rows, lanes,
                        blocks_per_core, total_blocks, has_spare, has_tail):
    c = pl.program_id(0)          # core-split axis ("parallel")
    i = pl.program_id(1)          # reduction axis ("arbitrary")
    blk = c * blocks_per_core + i

    @pl.when(i == 0)
    def _():
        o_ref[...] = jnp.zeros_like(o_ref)

    def accum(masked):
        d = (a_ref[...] - b_ref[...]).astype(jnp.float32)
        dsq = d * d
        if masked:
            # Clipped tail block: rows past the real extent hold stale VMEM
            # data -- zero them BEFORE the reduction.
            base = blk * block_rows
            row = jax.lax.broadcasted_iota(jnp.int32, dsq.shape, 0) + base
            dsq = jnp.where(row < rows_valid, dsq, 0.0)
        # vreg-shaped (8, lanes) partial: pure VPU adds hidden under the
        # input DMAs; the lone cross-lane reduce happens in XLA afterwards.
        o_ref[...] += jnp.sum(dsq.reshape(block_rows // 8, 8, lanes), axis=0)

    not_spare = (blk < total_blocks) if has_spare else True
    is_tail = blk == total_blocks - 1

    if not has_spare and not has_tail:
        accum(False)                       # fast path: no mask, no gating
    elif not has_tail:
        pl.when(not_spare)(lambda: accum(False))
    else:
        def guard(p):
            return jnp.logical_and(not_spare, p) if has_spare else p
        pl.when(guard(jnp.logical_not(is_tail)))(lambda: accum(False))
        pl.when(guard(is_tail))(lambda: accum(True))


def mse_loss(output, y, return_mean=True):
    assert output.shape == y.shape and output.dtype == y.dtype
    n = output.size
    kind = _tpu_kind()
    deep = _is_v7x(kind)
    vmem_limit = (48 if deep else 32) * 1024 * 1024
    itemsize = jnp.dtype(output.dtype).itemsize

    lanes = _pick_lanes(n)
    if lanes is not None:
        # Zero-copy lane-dense 2-D view (rows, lanes) of the flat data.
        rows = n // lanes
        block_rows = BLOCK_BYTES // (lanes * itemsize)
        if rows < block_rows:
            block_rows = _round_up(rows, _sublane(output.dtype))
        total_blocks = _cdiv(rows, block_rows)
        x2 = output.reshape(rows, lanes)
        y2 = y.reshape(rows, lanes)

        if return_mean:
            num_cores = _num_tensorcores(kind)
            bpc = _cdiv(total_blocks, num_cores)
            has_spare = num_cores * bpc != total_blocks
            has_tail = total_blocks * block_rows != rows

            def in_map(c, i):
                # Clamp so a spare block of an odd core split never starts
                # past the array; its accumulate is skipped in the kernel.
                return (jnp.minimum(c * bpc + i, total_blocks - 1), 0)

            partials = pl.pallas_call(
                functools.partial(
                    _mse_partial_kernel, rows_valid=rows,
                    block_rows=block_rows, lanes=lanes, blocks_per_core=bpc,
                    total_blocks=total_blocks, has_spare=has_spare,
                    has_tail=has_tail),
                out_shape=jax.ShapeDtypeStruct((num_cores * 8, lanes),
                                               jnp.float32),
                grid_spec=pltpu.PrefetchScalarGridSpec(
                    num_scalar_prefetch=0,
                    grid=(num_cores, bpc),
                    in_specs=[_in_spec((block_rows, lanes), in_map, deep),
                              _in_spec((block_rows, lanes), in_map, deep)],
                    out_specs=pl.BlockSpec((8, lanes), lambda c, i: (c, 0)),
                ),
                compiler_params=pltpu.CompilerParams(
                    dimension_semantics=("parallel", "arbitrary"),
                    vmem_limit_bytes=vmem_limit),
            )(x2, y2)
            # Tiny final reduce (num_cores*8*lanes f32) + mean in XLA.
            return (jnp.sum(partials) / n).astype(output.dtype)

        sq = pl.pallas_call(
            _sq_diff_kernel,
            out_shape=jax.ShapeDtypeStruct((rows, lanes), output.dtype),
            grid_spec=pltpu.PrefetchScalarGridSpec(
                num_scalar_prefetch=0,
                grid=(total_blocks,),
                in_specs=[_in_spec((block_rows, lanes), lambda i: (i, 0), deep),
                          _in_spec((block_rows, lanes), lambda i: (i, 0), deep)],
                out_specs=pl.BlockSpec((block_rows, lanes), lambda i: (i, 0)),
            ),
            compiler_params=pltpu.CompilerParams(
                dimension_semantics=("parallel",),
                vmem_limit_bytes=vmem_limit),
        )(x2, y2)
        return sq.reshape(output.shape)   # exact size -> free reshape

    # ---- Truly ragged sizes (n not a multiple of 128) ----------------------
    if return_mean:
        # A single fused XLA read-reduce is HBM-optimal (2n bytes) here; any
        # Pallas route would re-add a pad/slice copy for no bandwidth gain.
        d = (output.astype(jnp.float32) - y.astype(jnp.float32)).reshape(-1)
        return (jnp.sum(d * d) / n).astype(output.dtype)

    # Elementwise: 1-D flat blocks -- Pallas clips the ragged trailing block
    # on both read and write, so no pad copy in and no [:n] copy out.
    xf = output.reshape(-1)
    yf = y.reshape(-1)
    if n < 128:
        chunk = n
    else:
        chunk = min(BLOCK_BYTES // itemsize, (n // 128) * 128)
    try:
        sq = pl.pallas_call(
            _sq_diff_kernel,
            out_shape=jax.ShapeDtypeStruct((n,), output.dtype),
            grid_spec=pltpu.PrefetchScalarGridSpec(
                num_scalar_prefetch=0,
                grid=(_cdiv(n, chunk),),
                in_specs=[_in_spec((chunk,), lambda i: (i,), deep),
                          _in_spec((chunk,), lambda i: (i,), deep)],
                out_specs=pl.BlockSpec((chunk,), lambda i: (i,)),
            ),
            compiler_params=pltpu.CompilerParams(
                dimension_semantics=("parallel",),
                vmem_limit_bytes=vmem_limit),
        )(xf, yf)
        return sq.reshape(output.shape)
    except Exception:
        # Safety net: pad the flat tail to a 128-lane slab (one extra copy
        # per operand) and reuse the proven 2-D kernel.
        rows = _cdiv(n, 128)
        pad = rows * 128 - n
        xp = jnp.pad(xf, (0, pad)).reshape(rows, 128)
        yp = jnp.pad(yf, (0, pad)).reshape(rows, 128)
        block_rows = min(BLOCK_BYTES // (128 * itemsize),
                         _round_up(rows, _sublane(output.dtype)))
        sq = pl.pallas_call(
            _sq_diff_kernel,
            out_shape=jax.ShapeDtypeStruct((rows, 128), output.dtype),
            grid_spec=pltpu.PrefetchScalarGridSpec(
                num_scalar_prefetch=0,
                grid=(_cdiv(rows, block_rows),),
                in_specs=[pl.BlockSpec((block_rows, 128), lambda i: (i, 0)),
                          pl.BlockSpec((block_rows, 128), lambda i: (i, 0))],
                out_specs=pl.BlockSpec((block_rows, 128), lambda i: (i, 0)),
            ),
            compiler_params=pltpu.CompilerParams(
                dimension_semantics=("parallel",),
                vmem_limit_bytes=vmem_limit),
        )(xp, yp)
        return sq.reshape(-1)[:n].reshape(output.shape)


if __name__ == "__main__":
    key = jax.random.PRNGKey(0)
    k1, k2, k3, k4 = jax.random.split(key, 4)

    # Small NCHW-shaped example inputs (MSELoss is shape-agnostic).
    x = jax.random.normal(k1, (2, 4, 16, 16), dtype=jnp.float32)
    y = jax.random.normal(k2, (2, 4, 16, 16), dtype=jnp.float32)

    mean_loss = jax.block_until_ready(mse_loss(x, y, return_mean=True))
    elem_loss = jax.block_until_ready(mse_loss(x, y, return_mean=False))

    ref_mean = jnp.mean((x - y) ** 2)
    ref_elem = (x - y) ** 2
    assert jnp.allclose(mean_loss, ref_mean, rtol=1e-5, atol=1e-6), (
        mean_loss, ref_mean)
    assert jnp.allclose(elem_loss, ref_elem, rtol=1e-5, atol=1e-6)

    # Ragged shape (size not a multiple of 128) to exercise the flat 1-D
    # clipped-block elementwise path and the ragged mean path.
    xr = jax.random.normal(k3, (3, 5, 7, 11), dtype=jnp.float32)
    yr = jax.random.normal(k4, (3, 5, 7, 11), dtype=jnp.float32)
    mean_r = jax.block_until_ready(mse_loss(xr, yr, return_mean=True))
    elem_r = jax.block_until_ready(mse_loss(xr, yr, return_mean=False))
    assert jnp.allclose(mean_r, jnp.mean((xr - yr) ** 2), rtol=1e-5, atol=1e-6)
    assert jnp.allclose(elem_r, (xr - yr) ** 2, rtol=1e-5, atol=1e-6)

    print("KERNEL_OK")
</pallas_src>

<mosaic_0001>
module attributes {stable_mosaic.version = 11 : i64} {
  func.func @_mse_partial_kernel(%arg0: i32, %arg1: i32, %arg2: memref<8x512xf32, #tpu.memory_space<vmem>>, %arg3: memref<8x512xf32, #tpu.memory_space<vmem>>, %arg4: memref<8x512xf32, #tpu.memory_space<vmem>>) attributes {dimension_semantics = [#tpu.dimension_semantics<parallel>, #tpu.dimension_semantics<arbitrary>], iteration_bounds = array<i64: 1, 1>, scalar_prefetch = 0 : i64, scratch_operands = 0 : i64, tpu.core_type = #tpu.core_type<tc>, window_params = [{transform_indices = @transform_0, window_bounds = array<i64: 8, 512>}, {transform_indices = @transform_1, window_bounds = array<i64: 8, 512>}, {transform_indices = @transform_2, window_bounds = array<i64: 8, 512>}]} {
    %c1_i32 = arith.constant 1 : i32
    %0 = arith.muli %arg0, %c1_i32 : i32
    %1 = arith.addi %0, %arg1 : i32
    %c0_i32 = arith.constant 0 : i32
    %2 = arith.cmpi eq, %arg1, %c0_i32 : i32
    %3 = arith.extui %2 : i1 to i32
    %c0_i32_0 = arith.constant 0 : i32
    %4 = arith.cmpi ne, %3, %c0_i32_0 : i32
    scf.if %4 {
      %cst = arith.constant 0.000000e+00 : f32
      %11 = vector.broadcast %cst : f32 to vector<8x512xf32>
      %c0 = arith.constant 0 : index
      %c0_4 = arith.constant 0 : index
      %12 = vector.load %arg4[%c0, %c0_4] : memref<8x512xf32, #tpu.memory_space<vmem>>, vector<8x512xf32>
      tpu.vector_store %arg4[%c0, %c0_4], %11 {strides = array<i32>} : memref<8x512xf32, #tpu.memory_space<vmem>>, vector<8x512xf32>,
    } else {
    }
    %c0_i32_1 = arith.constant 0 : i32
    %5 = arith.cmpi eq, %1, %c0_i32_1 : i32
    %true = arith.constant true
    %6 = arith.xori %5, %true : i1
    %7 = arith.extui %6 : i1 to i32
    %c0_i32_2 = arith.constant 0 : i32
    %8 = arith.cmpi ne, %7, %c0_i32_2 : i32
    scf.if %8 {
      %c0 = arith.constant 0 : index
      %c0_4 = arith.constant 0 : index
      %11 = vector.load %arg2[%c0, %c0_4] : memref<8x512xf32, #tpu.memory_space<vmem>>, vector<8x512xf32>
      %c0_5 = arith.constant 0 : index
      %c0_6 = arith.constant 0 : index
      %12 = vector.load %arg3[%c0_5, %c0_6] : memref<8x512xf32, #tpu.memory_space<vmem>>, vector<8x512xf32>
      %13 = arith.subf %11, %12 : vector<8x512xf32>
      %14 = arith.mulf %13, %13 : vector<8x512xf32>
      %c0_7 = arith.constant 0 : index
      %c0_8 = arith.constant 0 : index
      %15 = vector.load %arg4[%c0_7, %c0_8] : memref<8x512xf32, #tpu.memory_space<vmem>>, vector<8x512xf32>
      %16 = vector.shape_cast %14 : vector<8x512xf32> to vector<1x8x512xf32>
      %cst = arith.constant dense<0.000000e+00> : vector<8x512xf32>
      %17 = vector.multi_reduction <add>, %16, %cst [0] : vector<1x8x512xf32> to vector<8x512xf32>
      %18 = arith.addf %15, %17 : vector<8x512xf32>
      %c0_9 = arith.constant 0 : index
      %c0_10 = arith.constant 0 : index
      %19 = vector.load %arg4[%c0_9, %c0_10] : memref<8x512xf32, #tpu.memory_space<vmem>>, vector<8x512xf32>
      tpu.vector_store %arg4[%c0_9, %c0_10], %18 {strides = array<i32>} : memref<8x512xf32, #tpu.memory_space<vmem>>, vector<8x512xf32>,
    } else {
    }
    %9 = arith.extui %5 : i1 to i32
    %c0_i32_3 = arith.constant 0 : i32
    %10 = arith.cmpi ne, %9, %c0_i32_3 : i32
    scf.if %10 {
      %c0 = arith.constant 0 : index
      %c0_4 = arith.constant 0 : index
      %11 = vector.load %arg2[%c0, %c0_4] : memref<8x512xf32, #tpu.memory_space<vmem>>, vector<8x512xf32>
      %c0_5 = arith.constant 0 : index
      %c0_6 = arith.constant 0 : index
      %12 = vector.load %arg3[%c0_5, %c0_6] : memref<8x512xf32, #tpu.memory_space<vmem>>, vector<8x512xf32>
      %13 = arith.subf %11, %12 : vector<8x512xf32>
      %14 = arith.mulf %13, %13 : vector<8x512xf32>
      %c8_i32 = arith.constant 8 : i32
      %15 = arith.muli %1, %c8_i32 : i32
      %16 = tpu.iota {dimensions = array<i32: 0>} : vector<8x512xi32>
      %17 = vector.broadcast %15 : i32 to vector<8x512xi32>
      %18 = arith.addi %16, %17 : vector<8x512xi32>
      %c4_i32 = arith.constant 4 : i32
      %19 = vector.broadcast %c4_i32 : i32 to vector<8x512xi32>
      %20 = arith.cmpi slt, %18, %19 : vector<8x512xi32>
      %cst = arith.constant 0.000000e+00 : f32
      %21 = vector.broadcast %cst : f32 to vector<8x512xf32>
      %22 = arith.select %20, %14, %21 : vector<8x512xi1>, vector<8x512xf32>
      %c0_7 = arith.constant 0 : index
      %c0_8 = arith.constant 0 : index
      %23 = vector.load %arg4[%c0_7, %c0_8] : memref<8x512xf32, #tpu.memory_space<vmem>>, vector<8x512xf32>
      %24 = vector.shape_cast %22 : vector<8x512xf32> to vector<1x8x512xf32>
      %cst_9 = arith.constant dense<0.000000e+00> : vector<8x512xf32>
      %25 = vector.multi_reduction <add>, %24, %cst_9 [0] : vector<1x8x512xf32> to vector<8x512xf32>
      %26 = arith.addf %23, %25 : vector<8x512xf32>
      %c0_10 = arith.constant 0 : index
      %c0_11 = arith.constant 0 : index
      %27 = vector.load %arg4[%c0_10, %c0_11] : memref<8x512xf32, #tpu.memory_space<vmem>>, vector<8x512xf32>
      tpu.vector_store %arg4[%c0_10, %c0_11], %26 {strides = array<i32>} : memref<8x512xf32, #tpu.memory_space<vmem>>, vector<8x512xf32>,
    } else {
    }
    return
  }
  func.func @transform_0(%arg0: i32, %arg1: i32) -> (i32, i32) {
    %c1_i32 = arith.constant 1 : i32
    %0 = arith.muli %arg0, %c1_i32 : i32
    %1 = arith.addi %0, %arg1 : i32
    %c0_i32 = arith.constant 0 : i32
    %2 = arith.minsi %1, %c0_i32 : i32
    %c0_i32_0 = arith.constant 0 : i32
    %c0_i32_1 = arith.constant 0 : i32
    return %2, %c0_i32_0 : i32, i32
  }
  func.func @transform_1(%arg0: i32, %arg1: i32) -> (i32, i32) {
    %c1_i32 = arith.constant 1 : i32
    %0 = arith.muli %arg0, %c1_i32 : i32
    %1 = arith.addi %0, %arg1 : i32
    %c0_i32 = arith.constant 0 : i32
    %2 = arith.minsi %1, %c0_i32 : i32
    %c0_i32_0 = arith.constant 0 : i32
    %c0_i32_1 = arith.constant 0 : i32
    return %2, %c0_i32_0 : i32, i32
  }
  func.func @transform_2(%arg0: i32, %arg1: i32) -> (i32, i32) {
    %c0_i32 = arith.constant 0 : i32
    %c0_i32_0 = arith.constant 0 : i32
    return %arg0, %c0_i32 : i32, i32
  }
}

</mosaic_0001>

<llo_original>
// kernel: tpu_custom_call.1
$region0: #{tpu_custom_call.1}
  #allocation0 [shape = 'u32[]', space=smem, size = 0x4, offset = 0x4, fixed_abs, tag = 'smem constant byte address 0x4 - core index']
  #allocation1 [shape = 'u32[72,128]{1,0:T(1,128)}', space=vmem, size = 0x9000, scoped, tag = 'internal scratch']
  %s0 = inlined_call_operand.hbm [shape: f32[4,512], index: 0, kind: input, shape index: {}]
  %s1 = inlined_call_operand.hbm [shape: f32[4,512], index: 1, kind: input, shape index: {}]
  %s2 = inlined_call_operand.hbm [shape: f32[8,512], index: 2, kind: output, shape index: {}]
  %s3 = sld [smem:[#allocation0]]
  $region38: #{tpu_custom_call.1} parent=0
    _
  %s5 = ssub.s32 1, %s3
  %s6 = scalar_select 0, %s5, %s3
  $region1: #{tpu_custom_call.1} parent=0
    #allocation2 [shape = 'u8[16384]{0}', space=vmem, size = 0x4000, scoped, tag = 'input window, operand 0, single buffered']
    #allocation3 [shape = 's32[1]{0}', space=sflag, size = 0x4, scoped, tag = 'scoped memory for tpu_custom_call.1']
    #allocation4 [shape = 's32[1]{0}', space=sflag, size = 0x4, scoped, tag = 'scoped memory for tpu_custom_call.1']
    #allocation5 [shape = 'u8[16384]{0}', space=vmem, size = 0x4000, scoped, tag = 'input window, operand 1, single buffered']
    #allocation6 [shape = 's32[1]{0}', space=sflag, size = 0x4, scoped, tag = 'scoped memory for tpu_custom_call.1']
    #allocation7 [shape = 'u8[16384]{0}', space=vmem, size = 0x4000, scoped, tag = 'output window, operand 0, single buffered']
    %7 = vsyncpa [#allocation3], 0
    %8 = vsyncpa [#allocation6], 0
    %9 = vsyncpa [#allocation4], 0
    // Predicated region
    $region2: #{tpu_custom_call.1} parent=1 // pred_check
      _
    $region3: #{tpu_custom_call.1} parent=1 // pred_check_branch
      %11 = sbr.rel (0) target = $region5
    $region4: #{tpu_custom_call.1} parent=1 // pred_region
      %s12 = sadd.s32 0, 0
      %p13 = scmp.lt.s32.totalorder %s12, 0
      %s14 = scalar_select %p13, %s12, 0
      %s15 = smul.u32 2, %s14
      %s16 = ssub.s32 1, %s15
      %s17 = smul.u32 4, %s16
      %s18 = smul.u32 %s17, 4
      %s19 = ssub.s32 32, %s18
      %s20 = sshll.u32 %s19, 4
      %21 = vsyncadd [#allocation3], %s20
      %p22 = scmp.ne.s32.totalorder 0, %s18
      %s23 = smul.addr %s15, 4
      %s24 = smul.addr %s23, 4
      %s25 = scalar_lea.hbm %s0, %s24
      %s26 = smul.u32 16, %s16
      %s27 = sshll.u32 %s25, 4
      %s28 = int_to_ptr.hbm [resolvable:$true] %s27
      %s29 = sshll.u32 [#allocation2], 4
      %s30 = int_to_ptr.vmem [resolvable:$true] %s29
      %s31 = sshll.u32 %s26, 4
      %35 = dma.hbm_to_vmem [thread:$0]  (%p22), %s28, %s31, %s30, [#allocation3], 256, 256, 16
    $region5: #{tpu_custom_call.1} parent=1 // pred_fallthru
      _
    // Predicated region
    $region6: #{tpu_custom_call.1} parent=1 // pred_check
      _
    $region7: #{tpu_custom_call.1} parent=1 // pred_check_branch
      %37 = sbr.rel (0) target = $region9
    $region8: #{tpu_custom_call.1} parent=1 // pred_region
      %s38 = sadd.s32 0, 0
      %p39 = scmp.lt.s32.totalorder %s38, 0
      %s40 = scalar_select %p39, %s38, 0
      %s41 = smul.u32 2, %s40
      %s42 = ssub.s32 1, %s41
      %s43 = smul.u32 4, %s42
      %s44 = smul.u32 %s43, 4
      %s45 = ssub.s32 32, %s44
      %s46 = sshll.u32 %s45, 4
      %47 = vsyncadd [#allocation6], %s46
      %p48 = scmp.ne.s32.totalorder 0, %s44
      %s49 = smul.addr %s41, 4
      %s50 = smul.addr %s49, 4
      %s51 = scalar_lea.hbm %s1, %s50
      %s52 = smul.u32 16, %s42
      %s53 = sshll.u32 %s51, 4
      %s54 = int_to_ptr.hbm [resolvable:$true] %s53
      %s55 = sshll.u32 [#allocation5], 4
      %s56 = int_to_ptr.vmem [resolvable:$true] %s55
      %s57 = sshll.u32 %s52, 4
      %61 = dma.hbm_to_vmem [thread:$0]  (%p48), %s54, %s57, %s56, [#allocation6], 256, 256, 16
    $region9: #{tpu_custom_call.1} parent=1 // pred_fallthru
      _
    // Predicated region
    $region10: #{tpu_custom_call.1} parent=1 // pred_check
      _
    $region11: #{tpu_custom_call.1} parent=1 // pred_check_branch
      %63 = sbr.rel (0) target = $region13
    $region12: #{tpu_custom_call.1} parent=1 // pred_region
      %65 = dma.done [#allocation3], 512
    $region13: #{tpu_custom_call.1} parent=1 // pred_fallthru
      _
    // Predicated region
    $region14: #{tpu_custom_call.1} parent=1 // pred_check
      _
    $region15: #{tpu_custom_call.1} parent=1 // pred_check_branch
      %67 = sbr.rel (0) target = $region17
    $region16: #{tpu_custom_call.1} parent=1 // pred_region
      %69 = dma.done [#allocation6], 512
    $region17: #{tpu_custom_call.1} parent=1 // pred_fallthru
      _
    %s70 = sadd.s32 0, 0
    %p71 = scmp.lt.s32.totalorder %s70, 0
    %s72 = scalar_select %p71, %s70, 0
    %s73 = smul.u32 2, %s72
    %s74 = ssub.s32 1, %s73
    %s75 = smul.u32 4, %s74
    %s76 = smul.u32 %s75, 4
    %s77 = sadd.s32 0, 0
    %p78 = scmp.lt.s32.totalorder %s77, 0
    %s79 = scalar_select %p78, %s77, 0
    %s80 = smul.u32 2, %s79
    %s81 = ssub.s32 1, %s80
    %s82 = smul.u32 4, %s81
    %s83 = smul.u32 %s82, 4
    %s84 = sadd.s32 0, 0
    %p85 = scmp.eq.s32.totalorder 0, 0
    // Predicated region
    $region18: #{tpu_custom_call.1} parent=1 // pred_check
      %p86 = pneg %p85
    $region19: #{tpu_custom_call.1} parent=1 // pred_check_branch
      %88 = sbr.rel (%p86) target = $region21
    $region20: #{tpu_custom_call.1} parent=1 // pred_region
      %89 = vst [vmem:[#allocation7] sm:$0xff] 0.0
      %90 = vst [vmem:[#allocation7 + $0x8] sm:$0xff] 0.0
      %91 = vst [vmem:[#allocation7 + $0x10] sm:$0xff] 0.0
      %92 = vst [vmem:[#allocation7 + $0x18] sm:$0xff] 0.0
    $region21: #{tpu_custom_call.1} parent=1 // pred_fallthru
      _
    %p93 = scmp.eq.s32.totalorder %s84, 0
    %p94 = scmp.ne.s32.totalorder %s84, 0
    // Predicated region
    $region22: #{tpu_custom_call.1} parent=1 // pred_check
      %p95 = pneg %p94
    $region23: #{tpu_custom_call.1} parent=1 // pred_check_branch
      %97 = sbr.rel (%p95) target = $region25
    $region24: #{tpu_custom_call.1} parent=1 // pred_region
      %v98 = vld [vmem:[#allocation2] sm:$0xff]
      %v99 = vld [vmem:[#allocation2 + $0x8] sm:$0xff]
      %v100 = vld [vmem:[#allocation2 + $0x10] sm:$0xff]
      %v101 = vld [vmem:[#allocation2 + $0x18] sm:$0xff]
      %v102 = vld [vmem:[#allocation5] sm:$0xff]
      %v103 = vld [vmem:[#allocation5 + $0x8] sm:$0xff]
      %v104 = vld [vmem:[#allocation5 + $0x10] sm:$0xff]
      %v105 = vld [vmem:[#allocation5 + $0x18] sm:$0xff]
      %v106 = vsub.f32 %v98, %v102
      %v107 = vsub.f32 %v99, %v103
      %v108 = vsub.f32 %v100, %v104
      %v109 = vsub.f32 %v101, %v105
      %v110 = vmul.f32 %v106, %v106
      %v111 = vmul.f32 %v107, %v107
      %v112 = vmul.f32 %v108, %v108
      %v113 = vmul.f32 %v109, %v109
      %v114 = vld [vmem:[#allocation7] sm:$0xff]
      %v115 = vld [vmem:[#allocation7 + $0x8] sm:$0xff]
      %v116 = vld [vmem:[#allocation7 + $0x10] sm:$0xff]
      %v117 = vld [vmem:[#allocation7 + $0x18] sm:$0xff]
      %v118 = vadd.f32 %v110, 0.0
      %v119 = vadd.f32 %v111, 0.0
      %v120 = vadd.f32 %v112, 0.0
      %v121 = vadd.f32 %v113, 0.0
      %126 = vst [vmem:[#allocation1] ss:$2 sm:$0xff] %v118
      %s127 = scalar_lea.vmem [#allocation1], 1
      %128 = vst [vmem:[%s127] ss:$2 sm:$0xff] %v120
      %s129 = scalar_lea.vmem [#allocation1], 16
      %130 = vst [vmem:[%s129] ss:$2 sm:$0xff] %v119
      %s131 = scalar_lea.vmem [#allocation1], 17
      %132 = vst [vmem:[%s131] ss:$2 sm:$0xff] %v121
      %v133 = vld.sshfl [vmem:[#allocation1] sm:$0xff pattern:$0x75316420]
      %v134 = vld.sshfl [vmem:[#allocation1 + $0x8] sm:$0xff pattern:$0x75316420]
      %v135 = vld.sshfl [vmem:[#allocation1 + $0x10] sm:$0xff pattern:$0x75316420]
      %v136 = vld.sshfl [vmem:[#allocation1 + $0x18] sm:$0xff pattern:$0x75316420]
      %v141 = vadd.f32 %v114, %v133
      %v142 = vadd.f32 %v115, %v134
      %v143 = vadd.f32 %v116, %v135
      %v144 = vadd.f32 %v117, %v136
      %145 = vst [vmem:[#allocation7] sm:$0xff] %v141
      %146 = vst [vmem:[#allocation7 + $0x8] sm:$0xff] %v142
      %147 = vst [vmem:[#allocation7 + $0x10] sm:$0xff] %v143
      %148 = vst [vmem:[#allocation7 + $0x18] sm:$0xff] %v144
    $region25: #{tpu_custom_call.1} parent=1 // pred_fallthru
      _
    // Predicated region
    $region26: #{tpu_custom_call.1} parent=1 // pred_check
      %p149 = pneg %p93
    $region27: #{tpu_custom_call.1} parent=1 // pred_check_branch
      %151 = sbr.rel (%p149) target = $region29
    $region28: #{tpu_custom_call.1} parent=1 // pred_region
      %v152 = vld [vmem:[#allocation2] sm:$0xff]
      %v153 = vld [vmem:[#allocation2 + $0x8] sm:$0xff]
      %v154 = vld [vmem:[#allocation2 + $0x10] sm:$0xff]
      %v155 = vld [vmem:[#allocation2 + $0x18] sm:$0xff]
      %v156 = vld [vmem:[#allocation5] sm:$0xff]
      %v157 = vld [vmem:[#allocation5 + $0x8] sm:$0xff]
      %v158 = vld [vmem:[#allocation5 + $0x10] sm:$0xff]
      %v159 = vld [vmem:[#allocation5 + $0x18] sm:$0xff]
      %v160 = vsub.f32 %v152, %v156
      %v161 = vsub.f32 %v153, %v157
      %v162 = vsub.f32 %v154, %v158
      %v163 = vsub.f32 %v155, %v159
      %v164 = vmul.f32 %v160, %v160
      %v165 = vmul.f32 %v161, %v161
      %v166 = vmul.f32 %v162, %v162
      %v167 = vmul.f32 %v163, %v163
      %s168 = smul.u32 %s84, 8
      %v169 = vlaneseq
      %v170 = vshrl.u32 %v169, 7
      %v171 = vstv %s168
      %v172 = vadd.s32 %v170, %v171
      %vm173 = vcmp.lt.s32.totalorder %v172, 4
      %178 = vst [vmem:[#allocation1] ss:$2 sm:$0xff] %v164
      %s179 = scalar_lea.vmem [#allocation1], 1
      %180 = vst [vmem:[%s179] ss:$2 sm:$0xff] %v166
      %s181 = scalar_lea.vmem [#allocation1], 16
      %182 = vst [vmem:[%s181] ss:$2 sm:$0xff] %v165
      %s183 = scalar_lea.vmem [#allocation1], 17
      %184 = vst [vmem:[%s183] ss:$2 sm:$0xff] %v167
      %v185 = vld.sshfl [vmem:[#allocation1] sm:$0xff pattern:$0x75316420]
      %v186 = vld.sshfl [vmem:[#allocation1 + $0x8] sm:$0xff pattern:$0x75316420]
      %v187 = vld.sshfl [vmem:[#allocation1 + $0x10] sm:$0xff pattern:$0x75316420]
      %v188 = vld.sshfl [vmem:[#allocation1 + $0x18] sm:$0xff pattern:$0x75316420]
      %v193 = vsel %vm173, %v185, 0.0
      %v194 = vsel %vm173, %v186, 0.0
      %v195 = vsel %vm173, %v187, 0.0
      %v196 = vsel %vm173, %v188, 0.0
      %v197 = vld [vmem:[#allocation7] sm:$0xff]
      %v198 = vld [vmem:[#allocation7 + $0x8] sm:$0xff]
      %v199 = vld [vmem:[#allocation7 + $0x10] sm:$0xff]
      %v200 = vld [vmem:[#allocation7 + $0x18] sm:$0xff]
      %v201 = vadd.f32 %v193, 0.0
      %v202 = vadd.f32 %v194, 0.0
      %v203 = vadd.f32 %v195, 0.0
      %v204 = vadd.f32 %v196, 0.0
      %v205 = vadd.f32 %v197, %v201
      %v206 = vadd.f32 %v198, %v202
      %v207 = vadd.f32 %v199, %v203
      %v208 = vadd.f32 %v200, %v204
      %209 = vst [vmem:[#allocation7] sm:$0xff] %v205
      %210 = vst [vmem:[#allocation7 + $0x8] sm:$0xff] %v206
      %211 = vst [vmem:[#allocation7 + $0x10] sm:$0xff] %v207
      %212 = vst [vmem:[#allocation7 + $0x18] sm:$0xff] %v208
    $region29: #{tpu_custom_call.1} parent=1 // pred_fallthru
      _
    // Predicated region
    $region30: #{tpu_custom_call.1} parent=1 // pred_check
      _
    $region31: #{tpu_custom_call.1} parent=1 // pred_check_branch
      %214 = sbr.rel (0) target = $region33
    $region32: #{tpu_custom_call.1} parent=1 // pred_region
      %216 = vsyncadd [#allocation4], 0
      %s218 = sshll.u32 [#allocation7], 4
      %s219 = int_to_ptr.vmem [resolvable:$true] %s218
      %s220 = sshll.u32 %s2, 4
      %s221 = int_to_ptr.hbm [resolvable:$true] %s220
      %223 = dma.vmem_to_hbm [thread:$0]  %s219, 512, %s221, [#allocation4]
    $region33: #{tpu_custom_call.1} parent=1 // pred_fallthru
      _
    // Predicated region
    $region34: #{tpu_custom_call.1} parent=1 // pred_check
      _
    $region35: #{tpu_custom_call.1} parent=1 // pred_check_branch
      %225 = sbr.rel (0) target = $region37
    $region36: #{tpu_custom_call.1} parent=1 // pred_region
      %227 = dma.done [#allocation4], 512
    $region37: #{tpu_custom_call.1} parent=1 // pred_fallthru
      _
    %228 = vsyncpa [#allocation3], 1
    %229 = vsyncpa [#allocation6], 1
    %230 = vsyncpa [#allocation4], 1

</llo_original>
